<compile_context>
chip_gen: v6e
topology: v6e:2x2x1
jax: 0.10.0
libtpu: 0.0.40
codegen_flags: <defaults>
</compile_context>

<pallas_src>
import jax
import jax.numpy as jnp
from jax.experimental import pallas as pl
from jax.experimental.pallas import tpu as pltpu


_LANES = 128
_SMALL_BYTES = 2 << 20           # below this, a single block is fine
_DEFAULT_BLOCK_BYTES = 4 << 20   # ~4 MiB per operand block (native dtype)


def _swish_kernel(x_ref, o_ref):
    x = x_ref[...]
    xf = x.astype(jnp.float32)
    # Numerically stable sigmoid: z = exp(-|x|) in (0, 1], never overflows.
    z = jnp.exp(-jnp.abs(xf))
    inv = 1.0 / (1.0 + z)                   # exact divide (free: mem-bound kernel)
    sig = jnp.where(xf >= 0, inv, z * inv)  # sigmoid(x)
    o_ref[...] = (xf * sig).astype(o_ref.dtype)


def _swish_2d(x2d, block_bytes):
    """Run the Pallas kernel on a (rows, 128) lane-dense slab."""
    rows = x2d.shape[0]
    dtype = x2d.dtype
    itemsize = jnp.dtype(dtype).itemsize

    # Sublane packing factor: f32 -> 8, bf16/f16 -> 16, int8/fp8 -> 32.
    sub_mult = 8 * max(1, 4 // max(itemsize, 1))

    total_bytes = rows * _LANES * itemsize
    # Target rows per block so a block is ~block_bytes in the native dtype.
    tr_target = max(sub_mult,
                    (block_bytes // (_LANES * itemsize)) // sub_mult * sub_mult)

    if total_bytes <= _SMALL_BYTES or rows <= sub_mult:
        # Tiny tensor: one block equal to the full array (always legal).
        tr = rows
    else:
        num_steps = pl.cdiv(rows, tr_target)
        # Guarantee an even step count >= 2 so v7x's two TensorCores both work
        # and stay balanced (no-op on single-TC v5e/v6e).
        if num_steps < 2:
            num_steps = 2
        elif num_steps % 2:
            num_steps += 1
        tr = pl.cdiv(rows, num_steps)
        # Round up to the sublane packing multiple; ragged last block is
        # handled by Pallas masking.
        tr = ((tr + sub_mult - 1) // sub_mult) * sub_mult
        tr = min(tr, rows)

    grid = (pl.cdiv(rows, tr),)

    # Size the scoped-VMEM request to the actual double-buffered footprint
    # (2 in + 2 out buffers) plus headroom, instead of a blanket 32 MiB.
    buffers_bytes = 4 * tr * _LANES * itemsize
    vmem_limit = min(max(buffers_bytes + (8 << 20), 16 << 20), 48 << 20)

    return pl.pallas_call(
        _swish_kernel,
        out_shape=jax.ShapeDtypeStruct((rows, _LANES), dtype),
        grid_spec=pltpu.PrefetchScalarGridSpec(
            num_scalar_prefetch=0,
            grid=grid,
            in_specs=[pl.BlockSpec((tr, _LANES), lambda i: (i, 0))],
            out_specs=pl.BlockSpec((tr, _LANES), lambda i: (i, 0)),
        ),
        compiler_params=pltpu.CompilerParams(
            dimension_semantics=("parallel",),   # megacore sharding on v7x
            vmem_limit_bytes=vmem_limit,
        ),
        # TODO(synk): expose input_output_aliases={0: 0} for a true
        # inplace=True variant once the caller donates the input buffer.
    )(x2d)


def swish(x, *, block_bytes=_DEFAULT_BLOCK_BYTES):
    """Applies Swish (x * sigmoid(x)) elementwise. Any shape / float dtype."""
    orig_shape = x.shape
    orig_dtype = x.dtype
    n = x.size

    if n == 0:
        return x

    n_main = (n // _LANES) * _LANES
    tail = n - n_main

    flat = jnp.ravel(x)  # free for contiguous inputs

    if tail == 0:
        # Common NN case: zero-copy reshape to a lane-dense slab.
        out_flat = _swish_2d(flat.reshape(n_main // _LANES, _LANES),
                             block_bytes).reshape(-1)
    elif n_main == 0:
        # Fewer than 128 elements: plain JAX, not worth a kernel launch.
        xf = flat.astype(jnp.float32)
        out_flat = (xf * jax.nn.sigmoid(xf)).astype(orig_dtype)
    else:
        # Ragged: kernel on the 128-aligned prefix, tiny XLA op on the tail.
        main = flat[:n_main].reshape(n_main // _LANES, _LANES)
        out_main = _swish_2d(main, block_bytes).reshape(-1)
        tf = flat[n_main:].astype(jnp.float32)
        out_tail = (tf * jax.nn.sigmoid(tf)).astype(orig_dtype)
        out_flat = jnp.concatenate([out_main, out_tail])

    return out_flat.reshape(orig_shape)


class SwishJit:
    """JAX/Pallas equivalent of the PyTorch SwishJit module (no parameters)."""

    def __init__(self, inplace: bool = False):
        del inplace  # no-op, matches PyTorch signature

    def __call__(self, x):
        return swish(x)


def _swish_ref(x):
    xf = x.astype(jnp.float32)
    return (xf * jax.nn.sigmoid(xf)).astype(x.dtype)


if __name__ == "__main__":
    key = jax.random.PRNGKey(0)
    x = jax.random.normal(key, (2, 4, 16, 16), dtype=jnp.float32) * 3.0  # NCHW

    mod = SwishJit()
    y = mod(x)
    y = jax.block_until_ready(y)

    y_ref = _swish_ref(x)
    assert y.shape == x.shape and y.dtype == x.dtype
    assert jnp.allclose(y, y_ref, rtol=1e-5, atol=1e-5)

    # Also exercise a ragged (non-multiple-of-128) size to cover the tail path.
    x2 = jax.random.normal(jax.random.PRNGKey(1), (3, 5, 7), dtype=jnp.float32)
    y2 = jax.block_until_ready(mod(x2))
    assert jnp.allclose(y2, _swish_ref(x2), rtol=1e-5, atol=1e-5)

    print("KERNEL_OK")
</pallas_src>

<mosaic_0001>
module attributes {stable_mosaic.version = 11 : i64} {
  func.func @_swish_kernel(%arg0: i32, %arg1: memref<16x128xf32, #tpu.memory_space<vmem>>, %arg2: memref<16x128xf32, #tpu.memory_space<vmem>>) attributes {dimension_semantics = [#tpu.dimension_semantics<parallel>], iteration_bounds = array<i64: 1>, scalar_prefetch = 0 : i64, scratch_operands = 0 : i64, tpu.core_type = #tpu.core_type<tc>, window_params = [{transform_indices = @transform_0, window_bounds = array<i64: 16, 128>}, {transform_indices = @transform_1, window_bounds = array<i64: 16, 128>}]} {
    %c0 = arith.constant 0 : index
    %c0_0 = arith.constant 0 : index
    %0 = vector.load %arg1[%c0, %c0_0] : memref<16x128xf32, #tpu.memory_space<vmem>>, vector<16x128xf32>
    %1 = math.absf %0 : vector<16x128xf32>
    %cst = arith.constant 0.000000e+00 : f32
    %2 = vector.broadcast %cst : f32 to vector<16x128xf32>
    %3 = arith.subf %2, %1 : vector<16x128xf32>
    %4 = math.exp %3 : vector<16x128xf32>
    %cst_1 = arith.constant 1.000000e+00 : f32
    %5 = vector.broadcast %cst_1 : f32 to vector<16x128xf32>
    %6 = arith.addf %5, %4 : vector<16x128xf32>
    %cst_2 = arith.constant 1.000000e+00 : f32
    %7 = vector.broadcast %cst_2 : f32 to vector<16x128xf32>
    %8 = arith.divf %7, %6 : vector<16x128xf32>
    %cst_3 = arith.constant 0.000000e+00 : f32
    %9 = vector.broadcast %cst_3 : f32 to vector<16x128xf32>
    %10 = arith.cmpf oge, %0, %9 : vector<16x128xf32>
    %11 = arith.mulf %4, %8 : vector<16x128xf32>
    %12 = arith.select %10, %8, %11 : vector<16x128xi1>, vector<16x128xf32>
    %13 = arith.mulf %0, %12 : vector<16x128xf32>
    %c0_4 = arith.constant 0 : index
    %c0_5 = arith.constant 0 : index
    %14 = vector.load %arg2[%c0_4, %c0_5] : memref<16x128xf32, #tpu.memory_space<vmem>>, vector<16x128xf32>
    tpu.vector_store %arg2[%c0_4, %c0_5], %13 {strides = array<i32>} : memref<16x128xf32, #tpu.memory_space<vmem>>, vector<16x128xf32>,
    return
  }
  func.func @transform_0(%arg0: i32) -> (i32, i32) {
    %c0_i32 = arith.constant 0 : i32
    %c0_i32_0 = arith.constant 0 : i32
    return %arg0, %c0_i32 : i32, i32
  }
  func.func @transform_1(%arg0: i32) -> (i32, i32) {
    %c0_i32 = arith.constant 0 : i32
    %c0_i32_0 = arith.constant 0 : i32
    return %arg0, %c0_i32 : i32, i32
  }
}

</mosaic_0001>

<llo_original>
// kernel: tpu_custom_call.1
$region0: #{tpu_custom_call.1}
  #allocation0 [shape = 'u32[]', space=smem, size = 0x4, offset = 0x4, fixed_abs, tag = 'smem constant byte address 0x4 - core index']
  #allocation1 [shape = 'u32[144,128]{1,0:T(1,128)}', space=vmem, size = 0x12000, scoped, tag = 'internal scratch']
  %s0 = inlined_call_operand.hbm [shape: f32[16,128], index: 0, kind: input, shape index: {}]
  %s1 = inlined_call_operand.hbm [shape: f32[16,128], index: 1, kind: output, shape index: {}]
  %s2 = sld [smem:[#allocation0]]
  $region18: #{tpu_custom_call.1} parent=0
    _
  %s4 = ssub.s32 1, %s2
  %s5 = scalar_select 0, %s4, %s2
  $region1: #{tpu_custom_call.1} parent=0
    #allocation2 [shape = 'u8[8192]{0}', space=vmem, size = 0x2000, scoped, tag = 'input window, operand 0, single buffered']
    #allocation3 [shape = 's32[1]{0}', space=sflag, size = 0x4, scoped, tag = 'scoped memory for tpu_custom_call.1']
    #allocation4 [shape = 's32[1]{0}', space=sflag, size = 0x4, scoped, tag = 'scoped memory for tpu_custom_call.1']
    #allocation5 [shape = 'u8[8192]{0}', space=vmem, size = 0x2000, scoped, tag = 'output window, operand 0, single buffered']
    %6 = vsyncpa [#allocation3], 0
    %7 = vsyncpa [#allocation4], 0
    // Predicated region
    $region2: #{tpu_custom_call.1} parent=1 // pred_check
      _
    $region3: #{tpu_custom_call.1} parent=1 // pred_check_branch
      %9 = sbr.rel (0) target = $region5
    $region4: #{tpu_custom_call.1} parent=1 // pred_region
      %s11 = ssub.s32 256, 256
      %12 = vsyncadd [#allocation3], %s11
      %s13 = sshll.u32 [#allocation2], 4
      %s14 = int_to_ptr.vmem [resolvable:$true] %s13
      %19 = dma.hbm_to_vmem [thread:$0]  %s0, 256, %s14, [#allocation3], 128, 128, 8
    $region5: #{tpu_custom_call.1} parent=1 // pred_fallthru
      _
    // Predicated region
    $region6: #{tpu_custom_call.1} parent=1 // pred_check
      _
    $region7: #{tpu_custom_call.1} parent=1 // pred_check_branch
      %21 = sbr.rel (0) target = $region9
    $region8: #{tpu_custom_call.1} parent=1 // pred_region
      %22 = dma.done [#allocation3], 256
    $region9: #{tpu_custom_call.1} parent=1 // pred_fallthru
      _
    %v23 = vld [vmem:[#allocation2] sm:$0xff]
    %v24 = vld [vmem:[#allocation2 + $0x8] sm:$0xff]
    %v25 = vand.u32 2147483647, %v23
    %v26 = vand.u32 2147483647, %v24
    %v27 = vsub.f32 0.0, %v25
    %v28 = vsub.f32 0.0, %v26
    %v29 = vmul.f32 %v27, 1.442695
    %v30 = vpow.pop %v29
    %v31 = vmul.f32 %v28, 1.442695
    %v32 = vpow.pop %v31
    %v33 = vadd.f32 %v30, 1.0
    %v34 = vadd.f32 %v32, 1.0
    %v35 = vrcp.pop %v33
    %v36 = vmul.f32 1.0, %v35
    %v37 = vrcp.pop %v34
    %v38 = vmul.f32 1.0, %v37
    %vm39 = vcmp.ge.f32.partialorder %v23, 0.0
    %vm40 = vcmp.ge.f32.partialorder %v24, 0.0
    %v41 = vmul.f32 %v30, %v36
    %v42 = vmul.f32 %v32, %v38
    %v43 = vsel %vm39, %v36, %v41
    %v44 = vsel %vm40, %v38, %v42
    %v45 = vmul.f32 %v23, %v43
    %v46 = vmul.f32 %v24, %v44
    %47 = vst [vmem:[#allocation5] sm:$0xff] %v45
    %48 = vst [vmem:[#allocation5 + $0x8] sm:$0xff] %v46
    // Predicated region
    $region10: #{tpu_custom_call.1} parent=1 // pred_check
      _
    $region11: #{tpu_custom_call.1} parent=1 // pred_check_branch
      %50 = sbr.rel (0) target = $region13
    $region12: #{tpu_custom_call.1} parent=1 // pred_region
      %s52 = ssub.s32 256, 256
      %53 = vsyncadd [#allocation4], %s52
      %s54 = sshll.u32 [#allocation5], 4
      %s55 = int_to_ptr.vmem [resolvable:$true] %s54
      %60 = dma.vmem_to_hbm [thread:$0]  %s55, 256, %s1, [#allocation4], 128, 128, 8
    $region13: #{tpu_custom_call.1} parent=1 // pred_fallthru
      _
    // Predicated region
    $region14: #{tpu_custom_call.1} parent=1 // pred_check
      _
    $region15: #{tpu_custom_call.1} parent=1 // pred_check_branch
      %62 = sbr.rel (0) target = $region17
    $region16: #{tpu_custom_call.1} parent=1 // pred_region
      %63 = dma.done [#allocation4], 256
    $region17: #{tpu_custom_call.1} parent=1 // pred_fallthru
      _
    %64 = vsyncpa [#allocation3], 1
    %65 = vsyncpa [#allocation4], 1

</llo_original>
